<compile_context>
chip_gen: v5e
topology: v5e:2x2
jax: 0.10.0
libtpu: 0.0.40
codegen_flags: <defaults>
</compile_context>

<pallas_src>
import jax
import jax.numpy as jnp
import numpy as np
from jax.experimental import pallas as pl
from jax.experimental.pallas import tpu as pltpu

EPS = 1e-5  # BatchNorm eps
F32 = jnp.float32
BF16 = jnp.bfloat16


# ----------------------------- Pallas kernels ------------------------------ #

def _stn_point_kernel(x_ref, sw1, sb1, sw2, sb2, sw3, sb3, pooled_ref, acc_ref):
    """STN3d point MLP (3->64->128->1024, bf16 MXU / f32 accum) with fused running max."""
    k = pl.program_id(1)

    @pl.when(k == 0)
    def _():
        acc_ref[...] = jnp.full_like(acc_ref, -jnp.inf)

    x = x_ref[0].astype(BF16)                                                # (TN, C)
    h = jnp.maximum(jnp.dot(x, sw1[...], preferred_element_type=F32) + sb1[...], 0.0)
    h = jnp.maximum(jnp.dot(h.astype(BF16), sw2[...], preferred_element_type=F32) + sb2[...], 0.0)
    h = jnp.maximum(jnp.dot(h.astype(BF16), sw3[...], preferred_element_type=F32) + sb3[...], 0.0)
    # max fused into the matmul epilogue: the (TN, 1024) tile is never written back
    acc_ref[...] = jnp.maximum(acc_ref[...], jnp.max(h, axis=0, keepdims=True))

    @pl.when(k == pl.num_programs(1) - 1)
    def _():
        pooled_ref[0] = acc_ref[...]                                         # (1, 1024)


def _stn_head_kernel(g_ref, fw1, fb1, fw2, fb2, fw3, fb3, t_ref):
    """Batched STN FC head: (B,1024)->512->256->9 (+identity folded into fb3). f32; tiny."""
    g = g_ref[...]                                                           # (B, 1024)
    h = jnp.maximum(jnp.dot(g, fw1[...], preferred_element_type=F32) + fb1[...], 0.0)
    h = jnp.maximum(jnp.dot(h, fw2[...], preferred_element_type=F32) + fb2[...], 0.0)
    t_ref[...] = jnp.dot(h, fw3[...], preferred_element_type=F32) + fb3[...]  # (B, 9)


def _encoder_kernel(x_ref, trans_ref, ew1, eb1, ew2, eb2, ew3, eb3, g_ref, acc_ref):
    """Input transform fused into layer 1 (w_eff = T @ W1), MLP 3->64->128->1024
    (last layer no ReLU), fused running max over points."""
    k = pl.program_id(1)

    @pl.when(k == 0)
    def _():
        acc_ref[...] = jnp.full_like(acc_ref, -jnp.inf)

    T = trans_ref[0]                                                         # (3, 3) f32
    # fold the per-point bmm(x, T) into the first layer's weights (tiny 3x3 @ 3x64)
    w_eff = jnp.dot(T, ew1[...].astype(F32), preferred_element_type=F32)     # (3, 64)

    x = x_ref[0].astype(BF16)                                                # (TN, 3)
    h = jnp.maximum(jnp.dot(x, w_eff.astype(BF16), preferred_element_type=F32) + eb1[...], 0.0)
    h = jnp.maximum(jnp.dot(h.astype(BF16), ew2[...], preferred_element_type=F32) + eb2[...], 0.0)
    h = jnp.dot(h.astype(BF16), ew3[...], preferred_element_type=F32) + eb3[...]   # BN, no ReLU
    acc_ref[...] = jnp.maximum(acc_ref[...], jnp.max(h, axis=0, keepdims=True))

    @pl.when(k == pl.num_programs(1) - 1)
    def _():
        g_ref[0] = acc_ref[...]                                              # (1, 1024)


# ------------------------------ JAX wrapper -------------------------------- #

def _const_spec(shape):
    """Whole-array block whose index never changes across the (b, k) grid."""
    nd = len(shape)
    return pl.BlockSpec(shape, lambda b, k, _nd=nd: (0,) * _nd)


def _pick_point_tile(n):
    """Largest point tile <= 1024 that divides N exactly (no padding -> no masking)."""
    if n <= 1024:
        return n
    for cand in (1024, 512, 256, 128):
        if n % cand == 0:
            return cand
    return n  # fallback: single full-N tile


def pointnet_encoder_forward(x_bcn, params):
    """x_bcn: (B, C, N) float32 (PyTorch NCW).  Returns (global_feat, trans, trans_feat)."""
    B, C, N = x_bcn.shape
    # TODO(synk): could feed (B, C, N) directly and work lane-dense in N to avoid this
    # transpose + the lane-padded (N, 3) tile; kept (B, N, C) for simplicity.
    x_bnc = jnp.transpose(x_bcn, (0, 2, 1))                                  # (B, N, C)

    tn = _pick_point_tile(N)
    n_tiles = N // tn
    grid = (B, n_tiles)
    dimsem = pltpu.CompilerParams(dimension_semantics=("parallel", "arbitrary"))

    # ---- STN3d point MLP + max pool (hot kernel, bf16 MXU) ----
    stn_point_names = ("sw1", "sb1", "sw2", "sb2", "sw3", "sb3")
    stn_point_p = [params[k] for k in stn_point_names]

    pooled = pl.pallas_call(
        _stn_point_kernel,
        out_shape=jax.ShapeDtypeStruct((B, 1, 1024), F32),
        grid=grid,
        in_specs=[pl.BlockSpec((1, tn, C), lambda b, k: (b, k, 0))]
                 + [_const_spec(p.shape) for p in stn_point_p],
        out_specs=pl.BlockSpec((1, 1, 1024), lambda b, k: (b, 0, 0)),
        scratch_shapes=[pltpu.VMEM((1, 1024), F32)],
        compiler_params=dimsem,
    )(x_bnc, *stn_point_p)
    pooled = pooled.reshape(B, 1024)

    # ---- STN3d FC head, batched over B (tiny kernel, whole arrays in VMEM) ----
    head_names = ("fw1", "fb1", "fw2", "fb2", "fw3", "fb3")
    head_p = [params[k] for k in head_names]
    trans9 = pl.pallas_call(
        _stn_head_kernel,
        out_shape=jax.ShapeDtypeStruct((B, 9), F32),
    )(pooled, *head_p)
    trans = trans9.reshape(B, 3, 3)                                          # (B, 3, 3)

    # ---- Encoder MLP + max pool (hot kernel, bf16 MXU, transform fused in) ----
    enc_names = ("ew1", "eb1", "ew2", "eb2", "ew3", "eb3")
    enc_p = [params[k] for k in enc_names]

    gfeat = pl.pallas_call(
        _encoder_kernel,
        out_shape=jax.ShapeDtypeStruct((B, 1, 1024), F32),
        grid=grid,
        in_specs=[pl.BlockSpec((1, tn, C), lambda b, k: (b, k, 0)),
                  pl.BlockSpec((1, 3, 3), lambda b, k: (b, 0, 0))]
                 + [_const_spec(p.shape) for p in enc_p],
        out_specs=pl.BlockSpec((1, 1, 1024), lambda b, k: (b, 0, 0)),
        scratch_shapes=[pltpu.VMEM((1, 1024), F32)],
        compiler_params=dimsem,
    )(x_bnc, trans, *enc_p)
    gfeat = gfeat.reshape(B, 1024)

    # pretrain=False, global_feat=True  ->  (x, trans, trans_feat=None)
    return gfeat, trans, None


# --------------------------- parameter construction ------------------------ #

def init_params(key, channel=3):
    """Deterministic synthetic parameters; eval-mode BatchNorm folded into (W, b).
    Point-MLP weights are stored bf16 (MXU native); biases and FC-head stay f32."""
    keys = iter(jax.random.split(key, 64))

    def dense(cin, cout):
        w = jax.random.normal(next(keys), (cin, cout), F32) / np.sqrt(cin)
        b = 0.02 * jax.random.normal(next(keys), (cout,), F32)
        return w, b

    def bn(c):
        gamma = 1.0 + 0.1 * jax.random.normal(next(keys), (c,), F32)
        beta = 0.02 * jax.random.normal(next(keys), (c,), F32)
        mean = 0.02 * jax.random.normal(next(keys), (c,), F32)
        var = 1.0 + 0.1 * jax.random.uniform(next(keys), (c,), F32)
        return gamma, beta, mean, var

    def fold(cin, cout):
        w, b = dense(cin, cout)
        g, bt, m, v = bn(cout)
        s = g / jnp.sqrt(v + EPS)
        return w * s[None, :], ((b - m) * s + bt).reshape(1, cout)

    p = {}
    # STN3d: conv1/2/3 + bn1/2/3, fc1/2 + bn4/5, fc3 (+ flattened identity)
    p["sw1"], p["sb1"] = fold(channel, 64)
    p["sw2"], p["sb2"] = fold(64, 128)
    p["sw3"], p["sb3"] = fold(128, 1024)
    p["fw1"], p["fb1"] = fold(1024, 512)
    p["fw2"], p["fb2"] = fold(512, 256)
    w3, b3 = dense(256, 9)
    iden = jnp.eye(3, dtype=F32).reshape(9)
    p["fw3"], p["fb3"] = w3, (b3 + iden).reshape(1, 9)
    # Encoder: conv1/2/3 + bn1/2/3
    p["ew1"], p["eb1"] = fold(channel, 64)
    p["ew2"], p["eb2"] = fold(64, 128)
    p["ew3"], p["eb3"] = fold(128, 1024)

    # bf16 weights for the point-MLP matmuls (hot path); f32 accumulation in-kernel.
    for k in ("sw1", "sw2", "sw3", "ew1", "ew2", "ew3"):
        p[k] = p[k].astype(BF16)
    return p


# ------------------------------ pure-JAX reference -------------------------- #

def reference_forward(x_bcn, p):
    up = lambda a: a.astype(F32)
    x = jnp.transpose(x_bcn, (0, 2, 1))                                      # (B, N, C)

    def lin3(h, w, b, relu=True):
        y = jnp.einsum("bnc,cd->bnd", h, up(w)) + b
        return jnp.maximum(y, 0.0) if relu else y

    def lin2(h, w, b, relu=True):
        y = h @ up(w) + b
        return jnp.maximum(y, 0.0) if relu else y

    h = lin3(x, p["sw1"], p["sb1"])
    h = lin3(h, p["sw2"], p["sb2"])
    h = lin3(h, p["sw3"], p["sb3"])
    g = jnp.max(h, axis=1)
    g = lin2(g, p["fw1"], p["fb1"])
    g = lin2(g, p["fw2"], p["fb2"])
    trans = lin2(g, p["fw3"], p["fb3"], relu=False).reshape(-1, 3, 3)
    xt = jnp.einsum("bnc,bcd->bnd", x, trans)
    h = lin3(xt, p["ew1"], p["eb1"])
    h = lin3(h, p["ew2"], p["eb2"])
    h = lin3(h, p["ew3"], p["eb3"], relu=False)
    gf = jnp.max(h, axis=1)
    return gf, trans, None


# ----------------------------------- main ----------------------------------- #

if __name__ == "__main__":
    B, C, N = 2, 3, 16
    key = jax.random.PRNGKey(0)
    kp, kx = jax.random.split(key)
    params = init_params(kp, channel=C)
    x = jax.random.normal(kx, (B, C, N), F32)

    out = pointnet_encoder_forward(x, params)
    out = jax.block_until_ready(out)
    gfeat, trans, trans_feat = out

    assert gfeat.shape == (B, 1024)
    assert trans.shape == (B, 3, 3)
    assert trans_feat is None

    gfeat_ref, trans_ref, _ = reference_forward(x, params)
    np.testing.assert_allclose(np.asarray(trans), np.asarray(trans_ref), rtol=3e-2, atol=3e-2)
    np.testing.assert_allclose(np.asarray(gfeat), np.asarray(gfeat_ref), rtol=3e-2, atol=3e-2)

    print("KERNEL_OK")
</pallas_src>

<mosaic_0001>
module attributes {stable_mosaic.version = 11 : i64} {
  func.func @_stn_point_kernel(%arg0: i32, %arg1: i32, %arg2: memref<1x16x3xf32, #tpu.memory_space<vmem>>, %arg3: memref<3x64xbf16, #tpu.memory_space<vmem>>, %arg4: memref<1x64xf32, #tpu.memory_space<vmem>>, %arg5: memref<64x128xbf16, #tpu.memory_space<vmem>>, %arg6: memref<1x128xf32, #tpu.memory_space<vmem>>, %arg7: memref<128x1024xbf16, #tpu.memory_space<vmem>>, %arg8: memref<1x1024xf32, #tpu.memory_space<vmem>>, %arg9: memref<1x1x1024xf32, #tpu.memory_space<vmem>>, %arg10: memref<1x1024xf32, #tpu.memory_space<vmem>>) attributes {dimension_semantics = [#tpu.dimension_semantics<parallel>, #tpu.dimension_semantics<arbitrary>], iteration_bounds = array<i64: 2, 1>, scalar_prefetch = 0 : i64, scratch_operands = 1 : i64, tpu.core_type = #tpu.core_type<tc>, window_params = [{transform_indices = @transform_0, window_bounds = array<i64: 1, 16, 3>}, {pipeline_mode = #tpu.pipeline_mode<synchronous>, transform_indices = @transform_1, window_bounds = array<i64: 3, 64>}, {pipeline_mode = #tpu.pipeline_mode<synchronous>, transform_indices = @transform_2, window_bounds = array<i64: 1, 64>}, {pipeline_mode = #tpu.pipeline_mode<synchronous>, transform_indices = @transform_3, window_bounds = array<i64: 64, 128>}, {pipeline_mode = #tpu.pipeline_mode<synchronous>, transform_indices = @transform_4, window_bounds = array<i64: 1, 128>}, {pipeline_mode = #tpu.pipeline_mode<synchronous>, transform_indices = @transform_5, window_bounds = array<i64: 128, 1024>}, {pipeline_mode = #tpu.pipeline_mode<synchronous>, transform_indices = @transform_6, window_bounds = array<i64: 1, 1024>}, {transform_indices = @transform_7, window_bounds = array<i64: 1, 1, 1024>}]} {
    %c0_i32 = arith.constant 0 : i32
    %0 = arith.cmpi eq, %arg1, %c0_i32 : i32
    %1 = arith.extui %0 : i1 to i32
    %c0_i32_0 = arith.constant 0 : i32
    %2 = arith.cmpi ne, %1, %c0_i32_0 : i32
    scf.if %2 {
      %cst_27 = arith.constant 0xFF800000 : f32
      %37 = vector.broadcast %cst_27 : f32 to vector<1x1024xf32>
      %c0_28 = arith.constant 0 : index
      %c0_29 = arith.constant 0 : index
      %38 = vector.load %arg10[%c0_28, %c0_29] : memref<1x1024xf32, #tpu.memory_space<vmem>>, vector<1x1024xf32>
      tpu.vector_store %arg10[%c0_28, %c0_29], %37 {strides = array<i32>} : memref<1x1024xf32, #tpu.memory_space<vmem>>, vector<1x1024xf32>,
    } else {
    }
    %c0 = arith.constant 0 : index
    %c0_1 = arith.constant 0 : index
    %c0_2 = arith.constant 0 : index
    %3 = vector.load %arg2[%c0, %c0_1, %c0_2] : memref<1x16x3xf32, #tpu.memory_space<vmem>>, vector<1x16x3xf32>
    %4 = vector.shape_cast %3 : vector<1x16x3xf32> to vector<16x3xf32>
    %5 = arith.truncf %4 : vector<16x3xf32> to vector<16x3xbf16>
    %c0_3 = arith.constant 0 : index
    %c0_4 = arith.constant 0 : index
    %6 = vector.load %arg3[%c0_3, %c0_4] : memref<3x64xbf16, #tpu.memory_space<vmem>>, vector<3x64xbf16>
    %cst = arith.constant dense<0.000000e+00> : vector<16x64xf32>
    %7 = tpu.matmul %5, %6, %cst {dimension_numbers = #tpu.dot_dimension_numbers<[1], [0], [0], [1], [0, 0, 1, 1], [], []>} : vector<16x3xbf16>, vector<3x64xbf16>, vector<16x64xf32> -> vector<16x64xf32>
    %c0_5 = arith.constant 0 : index
    %c0_6 = arith.constant 0 : index
    %8 = vector.load %arg4[%c0_5, %c0_6] : memref<1x64xf32, #tpu.memory_space<vmem>>, vector<1x64xf32>
    %9 = vector.broadcast %8 : vector<1x64xf32> to vector<16x64xf32>
    %10 = arith.addf %7, %9 : vector<16x64xf32>
    %cst_7 = arith.constant 0.000000e+00 : f32
    %11 = vector.broadcast %cst_7 : f32 to vector<16x64xf32>
    %12 = arith.maximumf %10, %11 : vector<16x64xf32>
    %13 = arith.truncf %12 : vector<16x64xf32> to vector<16x64xbf16>
    %c0_8 = arith.constant 0 : index
    %c0_9 = arith.constant 0 : index
    %14 = vector.load %arg5[%c0_8, %c0_9] : memref<64x128xbf16, #tpu.memory_space<vmem>>, vector<64x128xbf16>
    %cst_10 = arith.constant dense<0.000000e+00> : vector<16x128xf32>
    %15 = tpu.matmul %13, %14, %cst_10 {dimension_numbers = #tpu.dot_dimension_numbers<[1], [0], [0], [1], [0, 0, 1, 1], [], []>} : vector<16x64xbf16>, vector<64x128xbf16>, vector<16x128xf32> -> vector<16x128xf32>
    %c0_11 = arith.constant 0 : index
    %c0_12 = arith.constant 0 : index
    %16 = vector.load %arg6[%c0_11, %c0_12] : memref<1x128xf32, #tpu.memory_space<vmem>>, vector<1x128xf32>
    %17 = vector.broadcast %16 : vector<1x128xf32> to vector<16x128xf32>
    %18 = arith.addf %15, %17 : vector<16x128xf32>
    %cst_13 = arith.constant 0.000000e+00 : f32
    %19 = vector.broadcast %cst_13 : f32 to vector<16x128xf32>
    %20 = arith.maximumf %18, %19 : vector<16x128xf32>
    %21 = arith.truncf %20 : vector<16x128xf32> to vector<16x128xbf16>
    %c0_14 = arith.constant 0 : index
    %c0_15 = arith.constant 0 : index
    %22 = vector.load %arg7[%c0_14, %c0_15] : memref<128x1024xbf16, #tpu.memory_space<vmem>>, vector<128x1024xbf16>
    %cst_16 = arith.constant dense<0.000000e+00> : vector<16x1024xf32>
    %23 = tpu.matmul %21, %22, %cst_16 {dimension_numbers = #tpu.dot_dimension_numbers<[1], [0], [0], [1], [0, 0, 1, 1], [], []>} : vector<16x128xbf16>, vector<128x1024xbf16>, vector<16x1024xf32> -> vector<16x1024xf32>
    %c0_17 = arith.constant 0 : index
    %c0_18 = arith.constant 0 : index
    %24 = vector.load %arg8[%c0_17, %c0_18] : memref<1x1024xf32, #tpu.memory_space<vmem>>, vector<1x1024xf32>
    %25 = vector.broadcast %24 : vector<1x1024xf32> to vector<16x1024xf32>
    %26 = arith.addf %23, %25 : vector<16x1024xf32>
    %cst_19 = arith.constant 0.000000e+00 : f32
    %27 = vector.broadcast %cst_19 : f32 to vector<16x1024xf32>
    %28 = arith.maximumf %26, %27 : vector<16x1024xf32>
    %c0_20 = arith.constant 0 : index
    %c0_21 = arith.constant 0 : index
    %29 = vector.load %arg10[%c0_20, %c0_21] : memref<1x1024xf32, #tpu.memory_space<vmem>>, vector<1x1024xf32>
    %cst_22 = arith.constant dense<0xFF800000> : vector<1024xf32>
    %30 = vector.multi_reduction <maximumf>, %28, %cst_22 [0] : vector<16x1024xf32> to vector<1024xf32>
    %31 = vector.shape_cast %30 : vector<1024xf32> to vector<1x1024xf32>
    %32 = arith.maximumf %29, %31 : vector<1x1024xf32>
    %c0_23 = arith.constant 0 : index
    %c0_24 = arith.constant 0 : index
    %33 = vector.load %arg10[%c0_23, %c0_24] : memref<1x1024xf32, #tpu.memory_space<vmem>>, vector<1x1024xf32>
    tpu.vector_store %arg10[%c0_23, %c0_24], %32 {strides = array<i32>} : memref<1x1024xf32, #tpu.memory_space<vmem>>, vector<1x1024xf32>,
    %c0_i32_25 = arith.constant 0 : i32
    %34 = arith.cmpi eq, %arg1, %c0_i32_25 : i32
    %35 = arith.extui %34 : i1 to i32
    %c0_i32_26 = arith.constant 0 : i32
    %36 = arith.cmpi ne, %35, %c0_i32_26 : i32
    scf.if %36 {
      %c0_27 = arith.constant 0 : index
      %c0_28 = arith.constant 0 : index
      %37 = vector.load %arg10[%c0_27, %c0_28] : memref<1x1024xf32, #tpu.memory_space<vmem>>, vector<1x1024xf32>
      %c0_29 = arith.constant 0 : index
      %c0_30 = arith.constant 0 : index
      %c0_31 = arith.constant 0 : index
      %38 = vector.load %arg9[%c0_29, %c0_30, %c0_31] : memref<1x1x1024xf32, #tpu.memory_space<vmem>>, vector<1x1x1024xf32>
      %39 = vector.shape_cast %38 : vector<1x1x1024xf32> to vector<1x1024xf32>
      %40 = vector.shape_cast %37 : vector<1x1024xf32> to vector<1x1x1024xf32>
      tpu.vector_store %arg9[%c0_29, %c0_30, %c0_31], %40 {strides = array<i32>} : memref<1x1x1024xf32, #tpu.memory_space<vmem>>, vector<1x1x1024xf32>,
    } else {
    }
    return
  }
  func.func @transform_0(%arg0: i32, %arg1: i32) -> (i32, i32, i32) {
    %c0_i32 = arith.constant 0 : i32
    %c0_i32_0 = arith.constant 0 : i32
    return %arg0, %arg1, %c0_i32 : i32, i32, i32
  }
  func.func @transform_1(%arg0: i32, %arg1: i32) -> (i32, i32) {
    %c0_i32 = arith.constant 0 : i32
    %c0_i32_0 = arith.constant 0 : i32
    %c0_i32_1 = arith.constant 0 : i32
    return %c0_i32, %c0_i32_0 : i32, i32
  }
  func.func @transform_2(%arg0: i32, %arg1: i32) -> (i32, i32) {
    %c0_i32 = arith.constant 0 : i32
    %c0_i32_0 = arith.constant 0 : i32
    %c0_i32_1 = arith.constant 0 : i32
    return %c0_i32, %c0_i32_0 : i32, i32
  }
  func.func @transform_3(%arg0: i32, %arg1: i32) -> (i32, i32) {
    %c0_i32 = arith.constant 0 : i32
    %c0_i32_0 = arith.constant 0 : i32
    %c0_i32_1 = arith.constant 0 : i32
    return %c0_i32, %c0_i32_0 : i32, i32
  }
  func.func @transform_4(%arg0: i32, %arg1: i32) -> (i32, i32) {
    %c0_i32 = arith.constant 0 : i32
    %c0_i32_0 = arith.constant 0 : i32
    %c0_i32_1 = arith.constant 0 : i32
    return %c0_i32, %c0_i32_0 : i32, i32
  }
  func.func @transform_5(%arg0: i32, %arg1: i32) -> (i32, i32) {
    %c0_i32 = arith.constant 0 : i32
    %c0_i32_0 = arith.constant 0 : i32
    %c0_i32_1 = arith.constant 0 : i32
    return %c0_i32, %c0_i32_0 : i32, i32
  }
  func.func @transform_6(%arg0: i32, %arg1: i32) -> (i32, i32) {
    %c0_i32 = arith.constant 0 : i32
    %c0_i32_0 = arith.constant 0 : i32
    %c0_i32_1 = arith.constant 0 : i32
    return %c0_i32, %c0_i32_0 : i32, i32
  }
  func.func @transform_7(%arg0: i32, %arg1: i32) -> (i32, i32, i32) {
    %c0_i32 = arith.constant 0 : i32
    %c0_i32_0 = arith.constant 0 : i32
    %c0_i32_1 = arith.constant 0 : i32
    return %arg0, %c0_i32, %c0_i32_0 : i32, i32, i32
  }
}

</mosaic_0001>

<llo_original>
// kernel: tpu_custom_call.1
$region0: #{tpu_custom_call.1}
  #allocation0 [shape = 'u32[]', space=smem, size = 0x4, offset = 0x4, fixed_abs, tag = 'smem constant byte address 0x4 - core index']
  #allocation1 [shape = 'u32[72,128]{1,0:T(1,128)}', space=vmem, size = 0x9000, scoped, tag = 'internal scratch']
  #allocation2 [shape = 'f32[1,1024]{1,0:T(1,128)}', space=vmem, size = 0x1000, scoped, tag = 'scratch operand']
  %s0 = inlined_call_operand.vmem [shape: f32[2,16,3], index: 0, kind: input, shape index: {}]
  %s1 = inlined_call_operand.hbm [shape: bf16[3,64], index: 1, kind: input, shape index: {}]
  %s2 = inlined_call_operand.hbm [shape: f32[1,64], index: 2, kind: input, shape index: {}]
  %s3 = inlined_call_operand.vmem [shape: bf16[64,128], index: 3, kind: input, shape index: {}]
  %s4 = inlined_call_operand.vmem [shape: f32[1,128], index: 4, kind: input, shape index: {}]
  %s5 = inlined_call_operand.hbm [shape: bf16[128,1024], index: 5, kind: input, shape index: {}]
  %s6 = inlined_call_operand.vmem [shape: f32[1,1024], index: 6, kind: input, shape index: {}]
  %s7 = inlined_call_operand.hbm [shape: f32[2,1,1024], index: 7, kind: output, shape index: {}]
  %s8 = sld [smem:[#allocation0]]
  $region81: #{tpu_custom_call.1} parent=0
    _
  %s10 = ssub.s32 1, %s8
  %s11 = scalar_select 0, %s10, %s8
  $region1: #{tpu_custom_call.1} parent=0
    #allocation3 [shape = 'u8[1024]{0}', space=vmem, size = 0x400, scoped, tag = 'input window, operand 1, single buffered']
    #allocation4 [shape = 's32[2]{0}', space=sflag, size = 0x8, scoped, tag = 'scoped memory for tpu_custom_call.1']
    #allocation5 [shape = 's32[2]{0}', space=sflag, size = 0x8, scoped, tag = 'scoped memory for tpu_custom_call.1']
    #allocation6 [shape = 'u8[512]{0}', space=vmem, size = 0x400, scoped, tag = 'input window, operand 2, single buffered']
    #allocation7 [shape = 's32[1]{0}', space=sflag, size = 0x4, scoped, tag = 'scoped memory for tpu_custom_call.1']
    #allocation8 [shape = 'u8[262144]{0}', space=vmem, size = 0x40000, scoped, tag = 'input window, operand 5, single buffered']
    #allocation9 [shape = 'u8[8192]{0}', space=vmem, size = 0x2000, scoped, tag = 'output window, operand 0']
    %12 = vsyncpa [#allocation4], 0
    %13 = vsyncpa [#allocation7], 0
    %14 = vsyncpa [#allocation5], 0
    %s15 = scalar_lea.sflag [#allocation5], 1
    %16 = vsyncpa %s15, 0
    loop: start=0, step=1, limit=4
    $region2: #{tpu_custom_call.1} parent=1 // loop_pre_header
      _
    $region3: #{tpu_custom_call.1} parent=1 // loop_header
      %s18 = sphi 0, %s22
      %p19 = scmp.ge.s32.totalorder %s18, 4
      %s25 = sphi 0, %s37
      %s26 = sphi 0, %s33
      %s27 = sphi 0, %s25
      %s28 = sphi 0, %s26
      %s29 = sphi 0, %s27
      %s30 = sphi 0, %s28
      %s42 = sphi 0, %s44
      %s45 = sphi 0, %s42
      %s46 = sphi 0, %s45
      %s62 = sphi 0, %s46
      %s66 = sphi 0, %s66
      %s68 = sphi 0, %s66
      %s69 = sphi 0, %s68
      %s83 = sphi 0, %s69
      %s87 = sphi 0, %s87
      %s89 = sphi 0, %s87
      %s90 = sphi 0, %s89
      %s104 = sphi 0, %s90
      %s108 = sphi 0, %s108
      %s110 = sphi 0, %s108
      %s111 = sphi 0, %s110
      %s125 = sphi 0, %s111
      %s129 = sphi 0, %s129
      %s131 = sphi 0, %s129
      %s132 = sphi 0, %s131
      %s146 = sphi 0, %s132
      %s150 = sphi 0, %s150
      %s152 = sphi 0, %s150
      %s153 = sphi 0, %s152
      %s167 = sphi 0, %s153
      %s171 = sphi 0, %s171
      %s173 = sphi 0, %s171
      %s174 = sphi 0, %s173
      %s188 = sphi 0, %s174
      %s194 = sphi 0, %s196
      %s197 = sphi 0, %s194
      %s198 = sphi 0, %s197
      %s214 = sphi 0, %s198
    $region4: #{tpu_custom_call.1} parent=1 // loop_header_branch
      %21 = sbr.rel (%p19) target = $region8
    $region5: #{tpu_custom_call.1} parent=1 // loop_body
      %s23 = ssub.s32 %s18, 1
      %s24 = ssub.s32 %s18, 2
      %s31 = sadd.s32 1, %s26
      %p32 = scmp.ge.s32.totalorder %s31, 1
      %s33 = scalar_select %p32, 0, %s31
      %s34 = sadd.s32 1, %s25
      %s35 = scalar_select %p32, %s34, %s25
      %p36 = scmp.ge.s32.totalorder %s35, 2
      %s37 = scalar_select %p36, 0, %s35
      %s38 = ssub.s32 %s25, %s37
      %s39 = ssub.s32 %s26, %s33
      %s40 = sor.u32 %s38, %s39
      %p41 = scmp.eq.s32.totalorder %s40, 0
      %s43 = sadd.s32 %s42, 1
      %s44 = scalar_select %p41, %s42, %s43
      %p47 = pneg %p41
      %p48 = scmp.eq.s32.totalorder %s18, 1
      %p49 = por %p47, %p48
      %p50 = scmp.ne.s32.totalorder %s42, %s45
      %p51 = scmp.eq.s32.totalorder %s18, 0
      %p52 = por %p50, %p51
      %p53 = scmp.ne.s32.totalorder %s42, %s45
      %p54 = scmp.eq.s32.totalorder %s23, 1
      %p55 = por %p53, %p54
      %p56 = scmp.ne.s32.totalorder %s45, %s46
      %p57 = scmp.eq.s32.totalorder %s23, 0
      %p58 = por %p56, %p57
      %p59 = scmp.ne.s32.totalorder %s45, %s46
      %p60 = scmp.eq.s32.totalorder %s24, 1
      %p61 = por %p59, %p60
      %p63 = scmp.ne.s32.totalorder %s46, %s62
      %p64 = scmp.eq.s32.totalorder %s24, 0
      %p65 = por %p63, %p64
      %s67 = sadd.s32 %s66, 1
      %p70 = scmp.eq.s32.totalorder %s18, 1
      %p71 = scmp.ne.s32.totalorder %s66, %s68
      %p72 = scmp.eq.s32.totalorder %s18, 0
      %p73 = por %p71, %p72
      %p74 = scmp.ne.s32.totalorder %s66, %s68
      %p75 = scmp.eq.s32.totalorder %s23, 1
      %p76 = por %p74, %p75
      %p77 = scmp.ne.s32.totalorder %s68, %s69
      %p78 = scmp.eq.s32.totalorder %s23, 0
      %p79 = por %p77, %p78
      %p80 = scmp.ne.s32.totalorder %s68, %s69
      %p81 = scmp.eq.s32.totalorder %s24, 1
      %p82 = por %p80, %p81
      %p84 = scmp.ne.s32.totalorder %s69, %s83
      %p85 = scmp.eq.s32.totalorder %s24, 0
      %p86 = por %p84, %p85
      %s88 = sadd.s32 %s87, 1
      %p91 = scmp.eq.s32.totalorder %s18, 1
      %p92 = scmp.ne.s32.totalorder %s87, %s89
      %p93 = scmp.eq.s32.totalorder %s18, 0
      %p94 = por %p92, %p93
      %p95 = scmp.ne.s32.totalorder %s87, %s89
      %p96 = scmp.eq.s32.totalorder %s23, 1
      %p97 = por %p95, %p96
      %p98 = scmp.ne.s32.totalorder %s89, %s90
      %p99 = scmp.eq.s32.totalorder %s23, 0
      %p100 = por %p98, %p99
      %p101 = scmp.ne.s32.totalorder %s89, %s90
      %p102 = scmp.eq.s32.totalorder %s24, 1
      %p103 = por %p101, %p102
      %p105 = scmp.ne.s32.totalorder %s90, %s104
      %p106 = scmp.eq.s32.totalorder %s24, 0
      %p107 = por %p105, %p106
      %s109 = sadd.s32 %s108, 1
      %p112 = scmp.eq.s32.totalorder %s18, 1
      %p113 = scmp.ne.s32.totalorder %s108, %s110
      %p114 = scmp.eq.s32.totalorder %s18, 0
      %p115 = por %p113, %p114
      %p116 = scmp.ne.s32.totalorder %s108, %s110
      %p117 = scmp.eq.s32.totalorder %s23, 1
      %p118 = por %p116, %p117
      %p119 = scmp.ne.s32.totalorder %s110, %s111
      %p120 = scmp.eq.s32.totalorder %s23, 0
      %p121 = por %p119, %p120
      %p122 = scmp.ne.s32.totalorder %s110, %s111
      %p123 = scmp.eq.s32.totalorder %s24, 1
      %p124 = por %p122, %p123
      %p126 = scmp.ne.s32.totalorder %s111, %s125
      %p127 = scmp.eq.s32.totalorder %s24, 0
      %p128 = por %p126, %p127
      %s130 = sadd.s32 %s129, 1
      %p133 = scmp.eq.s32.totalorder %s18, 1
      %p134 = scmp.ne.s32.totalorder %s129, %s131
      %p135 = scmp.eq.s32.totalorder %s18, 0
      %p136 = por %p134, %p135
      %p137 = scmp.ne.s32.totalorder %s129, %s131
      %p138 = scmp.eq.s32.totalorder %s23, 1
      %p139 = por %p137, %p138
      %p140 = scmp.ne.s32.totalorder %s131, %s132
      %p141 = scmp.eq.s32.totalorder %s23, 0
      %p142 = por %p140, %p141
      %p143 = scmp.ne.s32.totalorder %s131, %s132
      %p144 = scmp.eq.s32.totalorder %s24, 1
      %p145 = por %p143, %p144
      %p147 = scmp.ne.s32.totalorder %s132, %s146
      %p148 = scmp.eq.s32.totalorder %s24, 0
      %p149 = por %p147, %p148
      %s151 = sadd.s32 %s150, 1
      %p154 = scmp.eq.s32.totalorder %s18, 1
      %p155 = scmp.ne.s32.totalorder %s150, %s152
      %p156 = scmp.eq.s32.totalorder %s18, 0
      %p157 = por %p155, %p156
      %p158 = scmp.ne.s32.totalorder %s150, %s152
      %p159 = scmp.eq.s32.totalorder %s23, 1
      %p160 = por %p158, %p159
      %p161 = scmp.ne.s32.totalorder %s152, %s153
      %p162 = scmp.eq.s32.totalorder %s23, 0
      %p163 = por %p161, %p162
      %p164 = scmp.ne.s32.totalorder %s152, %s153
      %p165 = scmp.eq.s32.totalorder %s24, 1
      %p166 = por %p164, %p165
      %p168 = scmp.ne.s32.totalorder %s153, %s167
      %p169 = scmp.eq.s32.totalorder %s24, 0
      %p170 = por %p168, %p169
      %s172 = sadd.s32 %s171, 1
      %p175 = scmp.eq.s32.totalorder %s18, 1
      %p176 = scmp.ne.s32.totalorder %s171, %s173
      %p177 = scmp.eq.s32.totalorder %s18, 0
      %p178 = por %p176, %p177
      %p179 = scmp.ne.s32.totalorder %s171, %s173
      %p180 = scmp.eq.s32.totalorder %s23, 1
      %p181 = por %p179, %p180
      %p182 = scmp.ne.s32.totalorder %s173, %s174
      %p183 = scmp.eq.s32.totalorder %s23, 0
      %p184 = por %p182, %p183
      %p185 = scmp.ne.s32.totalorder %s173, %s174
      %p186 = scmp.eq.s32.totalorder %s24, 1
      %p187 = por %p185, %p186
      %p189 = scmp.ne.s32.totalorder %s174, %s188
      %p190 = scmp.eq.s32.totalorder %s24, 0
      %p191 = por %p189, %p190
      %s192 = ssub.s32 %s25, %s37
      %p193 = scmp.eq.s32.totalorder %s192, 0
      %s195 = sadd.s32 %s194, 1
      %s196 = scalar_select %p193, %s194, %s195
      %p199 = pneg %p193
      %p200 = scmp.eq.s32.totalorder %s18, 1
      %p201 = por %p199, %p200
      %p202 = scmp.ne.s32.totalorder %s194, %s197
      %p203 = scmp.eq.s32.totalorder %s18, 0
      %p204 = por %p202, %p203
      %p205 = scmp.ne.s32.totalorder %s194, %s197
      %p206 = scmp.eq.s32.totalorder %s23, 1
      %p207 = por %p205, %p206
      %p208 = scmp.ne.s32.totalorder %s197, %s198
      %p209 = scmp.eq.s32.totalorder %s23, 0
      %p210 = por %p208, %p209
      %p211 = scmp.ne.s32.totalorder %s197, %s198
      %p212 = scmp.eq.s32.totalorder %s24, 1
      %p213 = por %p211, %p212
      %p215 = scmp.ne.s32.totalorder %s198, %s214
      %p216 = scmp.eq.s32.totalorder %s24, 0
      %p217 = por %p215, %p216
      %p218 = scmp.le.s32.totalorder 1, %s18
      %p219 = scmp.lt.s32.totalorder %s18, 3
      %p220 = pnand %p218, %p219
      %p221 = pneg %p220
      // Predicated region
      $region9: #{tpu_custom_call.1} parent=5 // pred_check
        _
      $region10: #{tpu_custom_call.1} parent=5 // pred_check_branch
        %223 = sbr.rel (%p220) target = $region12
      $region11: #{tpu_custom_call.1} parent=5 // pred_region
        %s224 = ssub.s32 %s18, 1
        // Predicated region
        $region13: #{tpu_custom_call.1} parent=11 // pred_check
          %p225 = pneg %p79
        $region14: #{tpu_custom_call.1} parent=11 // pred_check_branch
          %227 = sbr.rel (%p225) target = $region16
        $region15: #{tpu_custom_call.1} parent=11 // pred_region
          %229 = vsyncadd [#allocation4], 0
          %s231 = sshll.u32 %s1, 4
          %s232 = int_to_ptr.hbm [resolvable:$true] %s231
          %s233 = sshll.u32 [#allocation3], 4
          %s234 = int_to_ptr.vmem [resolvable:$true] %s233
          %236 = dma.hbm_to_vmem [thread:$0]  %s232, 32, %s234, [#allocation4]
        $region16: #{tpu_custom_call.1} parent=11 // pred_fallthru
          _
        // Predicated region
        $region17: #{tpu_custom_call.1} parent=11 // pred_check
          %p237 = pneg %p100
        $region18: #{tpu_custom_call.1} parent=11 // pred_check_branch
          %239 = sbr.rel (%p237) target = $region20
        $region19: #{tpu_custom_call.1} parent=11 // pred_region
          %241 = vsyncadd [#allocation7], 0
          %s243 = sshll.u32 %s2, 4
          %s244 = int_to_ptr.hbm [resolvable:$true] %s243
          %s245 = sshll.u32 [#allocation6], 4
          %s246 = int_to_ptr.vmem [resolvable:$true] %s245
          %248 = dma.hbm_to_vmem [thread:$0]  %s244, 16, %s246, [#allocation7]
        $region20: #{tpu_custom_call.1} parent=11 // pred_fallthru
          _
        // Predicated region
        $region21: #{tpu_custom_call.1} parent=11 // pred_check
          %p249 = pneg %p121
        $region22: #{tpu_custom_call.1} parent=11 // pred_check_branch
          %251 = sbr.rel (%p249) target = $region24
        $region23: #{tpu_custom_call.1} parent=11 // pred_region
          _
        $region24: #{tpu_custom_call.1} parent=11 // pred_fallthru
          _
        // Predicated region
        $region25: #{tpu_custom_call.1} parent=11 // pred_check
          %p252 = pneg %p142
        $region26: #{tpu_custom_call.1} parent=11 // pred_check_branch
          %254 = sbr.rel (%p252) target = $region28
        $region27: #{tpu_custom_call.1} parent=11 // pred_region
          _
        $region28: #{tpu_custom_call.1} parent=11 // pred_fallthru
          _
        // Predicated region
        $region29: #{tpu_custom_call.1} parent=11 // pred_check
          %p255 = pneg %p163
        $region30: #{tpu_custom_call.1} parent=11 // pred_check_branch
          %257 = sbr.rel (%p255) target = $region32
        $region31: #{tpu_custom_call.1} parent=11 // pred_region
          %259 = vsyncadd [#allocation7], 0
          %s260 = sshll.u32 %s5, 4
          %s261 = int_to_ptr.hbm [resolvable:$true] %s260
          %s262 = sshll.u32 [#allocation8], 4
          %s263 = int_to_ptr.vmem [resolvable:$true] %s262
          %268 = dma.hbm_to_vmem [thread:$0]  %s261, 8192, %s263, [#allocation7], 512, 512, 32
        $region32: #{tpu_custom_call.1} parent=11 // pred_fallthru
          _
        // Predicated region
        $region33: #{tpu_custom_call.1} parent=11 // pred_check
          %p269 = pneg %p184
        $region34: #{tpu_custom_call.1} parent=11 // pred_check_branch
          %271 = sbr.rel (%p269) target = $region36
        $region35: #{tpu_custom_call.1} parent=11 // pred_region
          _
        $region36: #{tpu_custom_call.1} parent=11 // pred_fallthru
          _
      $region12: #{tpu_custom_call.1} parent=5 // pred_fallthru
        _
      %p272 = scmp.lt.s32.totalorder %s18, 2
      // Predicated region
      $region37: #{tpu_custom_call.1} parent=5 // pred_check
        %p273 = pneg %p272
      $region38: #{tpu_custom_call.1} parent=5 // pred_check_branch
        %275 = sbr.rel (%p273) target = $region40
      $region39: #{tpu_custom_call.1} parent=5 // pred_region
        // Predicated region
        $region41: #{tpu_custom_call.1} parent=39 // pred_check
          %p276 = pneg %p52
        $region42: #{tpu_custom_call.1} parent=39 // pred_check_branch
          %278 = sbr.rel (%p276) target = $region44
        $region43: #{tpu_custom_call.1} parent=39 // pred_region
          %s279 = smul.u32 2, %s26
          %p280 = scmp.lt.s32.totalorder %s25, 1
          %s281 = scalar_select %p280, %s25, 1
          %p282 = scmp.lt.s32.totalorder %s279, 1
          %s283 = scalar_select %p282, %s279, 1
          %s284 = smul.addr %s281, 2
          %s285 = sadd.s32 %s283, %s284
          %s286 = smul.addr %s285, 8
          %s287 = scalar_lea.vmem %s0, %s286
          %s288 = smul.u32 2, %s26
        $region44: #{tpu_custom_call.1} parent=39 // pred_fallthru
          _
      $region40: #{tpu_custom_call.1} parent=5 // pred_fallthru
        _
      %p289 = scmp.le.s32.totalorder 1, %s18
      %p290 = scmp.lt.s32.totalorder %s18, 3
      %p291 = pnand %p289, %p290
      %p292 = pneg %p291
      // Predicated region
      $region45: #{tpu_custom_call.1} parent=5 // pred_check
        _
      $region46: #{tpu_custom_call.1} parent=5 // pred_check_branch
        %294 = sbr.rel (%p291) target = $region48
      $region47: #{tpu_custom_call.1} parent=5 // pred_region
        %s295 = ssub.s32 %s18, 1
        // Predicated region
        $region49: #{tpu_custom_call.1} parent=47 // pred_check
          %p296 = pneg %p79
        $region50: #{tpu_custom_call.1} parent=47 // pred_check_branch
          %298 = sbr.rel (%p296) target = $region52
        $region51: #{tpu_custom_call.1} parent=47 // pred_region
          %300 = dma.done [#allocation4], 32
        $region52: #{tpu_custom_call.1} parent=47 // pred_fallthru
          _
        // Predicated region
        $region53: #{tpu_custom_call.1} parent=47 // pred_check
          %p301 = pneg %p100
        $region54: #{tpu_custom_call.1} parent=47 // pred_check_branch
          %303 = sbr.rel (%p301) target = $region56
        $region55: #{tpu_custom_call.1} parent=47 // pred_region
          %305 = dma.done [#allocation7], 16
        $region56: #{tpu_custom_call.1} parent=47 // pred_fallthru
          _
        // Predicated region
        $region57: #{tpu_custom_call.1} parent=47 // pred_check
          %p306 = pneg %p163
        $region58: #{tpu_custom_call.1} parent=47 // pred_check_branch
          %308 = sbr.rel (%p306) target = $region60
        $region59: #{tpu_custom_call.1} parent=47 // pred_region
          %310 = dma.done [#allocation7], 8192
        $region60: #{tpu_custom_call.1} parent=47 // pred_fallthru
          _
        %s311 = smul.u32 2, %s28
        %p312 = scmp.lt.s32.totalorder %s27, 1
        %s313 = scalar_select %p312, %s27, 1
        %p314 = scmp.lt.s32.totalorder %s311, 1
        %s315 = scalar_select %p314, %s311, 1
        %s316 = smul.addr %s313, 2
        %s317 = sadd.s32 %s315, %s316
        %s318 = smul.addr %s317, 8
        %s319 = scalar_lea.vmem %s0, %s318
        %p320 = pneg %p58
        %p321 = pneg %p55
        %p322 = pneg %p79
        %p323 = pneg %p76
        %p324 = pneg %p100
        %p325 = pneg %p97
        %p326 = pneg %p121
        %p327 = pneg %p118
        %p328 = pneg %p142
        %p329 = pneg %p139
        %p330 = pneg %p163
        %p331 = pneg %p160
        %p332 = pneg %p184
        %p333 = pneg %p181
        %p334 = pneg %p210
        %p335 = pneg %p207
        %s336 = sand.u32 %s197, 1
        %s337 = scalar_lea.sflag [#allocation5], %s336
        %s338 = sand.u32 %s197, 1
        %s339 = smul.addr %s338, 8
        %s340 = scalar_lea.vmem [#allocation9], %s339
        %s341 = smul.u32 2, %s28
        %p342 = scmp.lt.s32.totalorder %s27, 1
        %s343 = scalar_select %p342, %s27, 1
        %p344 = scmp.lt.s32.totalorder %s341, 1
        %s345 = scalar_select %p344, %s341, 1
        %s346 = smul.addr %s343, 2
        %s347 = sadd.s32 %s345, %s346
        %s348 = smul.addr %s347, 8
        %s349 = scalar_lea.vmem %s0, %s348
        %s350 = smul.u32 2, %s28
        %p352 = scmp.eq.s32.totalorder %s28, 0
        // Predicated region
        $region61: #{tpu_custom_call.1} parent=47 // pred_check
          %p353 = pneg %p352
        $region62: #{tpu_custom_call.1} parent=47 // pred_check_branch
          %355 = sbr.rel (%p353) target = $region64
        $region63: #{tpu_custom_call.1} parent=47 // pred_region
          %356 = vst [vmem:[#allocation2] sm:$0xff] -inf
        $region64: #{tpu_custom_call.1} parent=47 // pred_fallthru
          _
        %v357 = vld [vmem:[%s349] sm:$0xff]
        %v358 = vld [vmem:[%s349 + $0x8] sm:$0xff]
        %v359 = vpack.c.bf16 %v358, %v357
        %v360 = vld [vmem:[#allocation3] sm:$0x3]
        %v361 = vld [vmem:[#allocation6] sm:$0x1]
        %v363 = vperm.slane %v361, 0
        %vm365 = vcmask 23552
        %v367 = vsel %vm365, %v359, 0
        %vm369 = vcmask 1040384
        %vm370 = vcmask 1041408
        %v371 = vsel %vm369, 4294967295, 65535
        %v372 = vsel %vm370, %v371, 0
        %v374 = vand.u32 %v360, %v372
        %376 = vmatpush.bf16.msra.mxu0 0
        %377 = vmatpush.bf16.msra.mxu0 0
        %378 = vmatpush.bf16.msra.mxu0 0
        %379 = vmatpush.bf16.msra.mxu0 0
        %380 = vmatpush.bf16.msra.mxu0 0
        %381 = vmatpush.bf16.msra.mxu0 0
        %382 = vmatpush.bf16.msra.mxu0 0
        %383 = vmatpush.bf16.msra.mxu0 %v374
        %384 = vmatmul.bf16.gmra.mxu0 %v367
        %v385 = vpop.f32.mrf.mxu0
        %v386 = vadd.f32 %v363, %v385
        %v387 = vpop.f32.mrf.mxu0
        %v388 = vadd.f32 %v363, %v387
        %389 = vdwg.mxu0
        %v390 = vmax.f32 %v386, 0.0
        %v391 = vmax.f32 %v388, 0.0
        %v392 = vpack.c.bf16 %v391, %v390
        %v393 = vld [vmem:[%s3] sm:$0xf]
        %v394 = vld [vmem:[%s3 + $0x4] sm:$0xf]
        %v395 = vld [vmem:[%s3 + $0x8] sm:$0xf]
        %v396 = vld [vmem:[%s3 + $0xc] sm:$0xf]
        %v397 = vld [vmem:[%s3 + $0x10] sm:$0xf]
        %v398 = vld [vmem:[%s3 + $0x14] sm:$0xf]
        %v399 = vld [vmem:[%s3 + $0x18] sm:$0xf]
        %v400 = vld [vmem:[%s3 + $0x1c] sm:$0xf]
        %v401 = vld [vmem:[%s4] sm:$0x1]
        %v403 = vperm.slane %v401, 0
        %v413 = vunpack.c.l.b16 %v393
        %v414 = vunpack.c.l.b16 %v394
        %v415 = vunpack.c.l.b16 %v395
        %v416 = vunpack.c.l.b16 %v396
        %v417 = vunpack.c.l.b16 %v397
        %v418 = vunpack.c.l.b16 %v398
        %v419 = vunpack.c.l.b16 %v399
        %v420 = vunpack.c.l.b16 %v400
        %v421 = vpack.c.b16 %v414, %v413
        %v422 = vpack.c.b16 %v416, %v415
        %v423 = vpack.c.b16 %v418, %v417
        %v424 = vpack.c.b16 %v420, %v419
        %vm429 = vcmask 523264
        %v431 = vsel %vm429, %v392, 0
        %433 = vmatpush.bf16.msra.mxu0 0
        %434 = vmatpush.bf16.msra.mxu0 0
        %435 = vmatpush.bf16.msra.mxu0 0
        %436 = vmatpush.bf16.msra.mxu0 0
        %437 = vmatpush.bf16.msra.mxu0 %v424
        %438 = vmatpush.bf16.msra.mxu0 %v423
        %439 = vmatpush.bf16.msra.mxu0 %v422
        %440 = vmatpush.bf16.msra.mxu0 %v421
        %441 = vmatmul.bf16.gmra.mxu0 %v431
        %v442 = vpop.f32.mrf.mxu0
        %v443 = vadd.f32 %v403, %v442
        %v444 = vpop.f32.mrf.mxu0
        %v445 = vadd.f32 %v403, %v444
        %446 = vdwg.mxu0
        %v447 = vmax.f32 %v443, 0.0
        %v448 = vmax.f32 %v445, 0.0
        %v449 = vpack.c.bf16 %v448, %v447
        %v450 = vld [vmem:[#allocation8] sm:$0xff]
        %v451 = vld [vmem:[#allocation8 + $0x8] sm:$0xff]
        %v452 = vld [vmem:[#allocation8 + $0x10] sm:$0xff]
        %v453 = vld [vmem:[#allocation8 + $0x18] sm:$0xff]
        %v454 = vld [vmem:[#allocation8 + $0x20] sm:$0xff]
        %v455 = vld [vmem:[#allocation8 + $0x28] sm:$0xff]
        %v456 = vld [vmem:[#allocation8 + $0x30] sm:$0xff]
        %v457 = vld [vmem:[#allocation8 + $0x38] sm:$0xff]
        %v458 = vld [vmem:[#allocation8 + $0x40] sm:$0xff]
        %v459 = vld [vmem:[#allocation8 + $0x48] sm:$0xff]
        %v460 = vld [vmem:[#allocation8 + $0x50] sm:$0xff]
        %v461 = vld [vmem:[#allocation8 + $0x58] sm:$0xff]
        %v462 = vld [vmem:[#allocation8 + $0x60] sm:$0xff]
        %v463 = vld [vmem:[#allocation8 + $0x68] sm:$0xff]
        %v464 = vld [vmem:[#allocation8 + $0x70] sm:$0xff]
        %v465 = vld [vmem:[#allocation8 + $0x78] sm:$0xff]
        %v466 = vld [vmem:[#allocation8 + $0x80] sm:$0xff]
        %v467 = vld [vmem:[#allocation8 + $0x88] sm:$0xff]
        %v468 = vld [vmem:[#allocation8 + $0x90] sm:$0xff]
        %v469 = vld [vmem:[#allocation8 + $0x98] sm:$0xff]
        %v470 = vld [vmem:[#allocation8 + $0xa0] sm:$0xff]
        %v471 = vld [vmem:[#allocation8 + $0xa8] sm:$0xff]
        %v472 = vld [vmem:[#allocation8 + $0xb0] sm:$0xff]
        %v473 = vld [vmem:[#allocation8 + $0xb8] sm:$0xff]
        %v474 = vld [vmem:[#allocation8 + $0xc0] sm:$0xff]
        %v475 = vld [vmem:[#allocation8 + $0xc8] sm:$0xff]
        %v476 = vld [vmem:[#allocation8 + $0xd0] sm:$0xff]
        %v477 = vld [vmem:[#allocation8 + $0xd8] sm:$0xff]
        %v478 = vld [vmem:[#allocation8 + $0xe0] sm:$0xff]
        %v479 = vld [vmem:[#allocation8 + $0xe8] sm:$0xff]
        %v480 = vld [vmem:[#allocation8 + $0xf0] sm:$0xff]
        %v481 = vld [vmem:[#allocation8 + $0xf8] sm:$0xff]
        %v482 = vld [vmem:[#allocation8 + $0x100] sm:$0xff]
        %v483 = vld [vmem:[#allocation8 + $0x108] sm:$0xff]
        %v484 = vld [vmem:[#allocation8 + $0x110] sm:$0xff]
        %v485 = vld [vmem:[#allocation8 + $0x118] sm:$0xff]
        %v486 = vld [vmem:[#allocation8 + $0x120] sm:$0xff]
        %v487 = vld [vmem:[#allocation8 + $0x128] sm:$0xff]
        %v488 = vld [vmem:[#allocation8 + $0x130] sm:$0xff]
        %v489 = vld [vmem:[#allocation8 + $0x138] sm:$0xff]
        %v490 = vld [vmem:[#allocation8 + $0x140] sm:$0xff]
        %v491 = vld [vmem:[#allocation8 + $0x148] sm:$0xff]
        %v492 = vld [vmem:[#allocation8 + $0x150] sm:$0xff]
        %v493 = vld [vmem:[#allocation8 + $0x158] sm:$0xff]
        %v494 = vld [vmem:[#allocation8 + $0x160] sm:$0xff]
        %v495 = vld [vmem:[#allocation8 + $0x168] sm:$0xff]
        %v496 = vld [vmem:[#allocation8 + $0x170] sm:$0xff]
        %v497 = vld [vmem:[#allocation8 + $0x178] sm:$0xff]
        %v498 = vld [vmem:[#allocation8 + $0x180] sm:$0xff]
        %v499 = vld [vmem:[#allocation8 + $0x188] sm:$0xff]
        %v500 = vld [vmem:[#allocation8 + $0x190] sm:$0xff]
        %v501 = vld [vmem:[#allocation8 + $0x198] sm:$0xff]
        %v502 = vld [vmem:[#allocation8 + $0x1a0] sm:$0xff]
        %v503 = vld [vmem:[#allocation8 + $0x1a8] sm:$0xff]
        %v504 = vld [vmem:[#allocation8 + $0x1b0] sm:$0xff]
        %v505 = vld [vmem:[#allocation8 + $0x1b8] sm:$0xff]
        %v506 = vld [vmem:[#allocation8 + $0x1c0] sm:$0xff]
        %v507 = vld [vmem:[#allocation8 + $0x1c8] sm:$0xff]
        %v508 = vld [vmem:[#allocation8 + $0x1d0] sm:$0xff]
        %v509 = vld [vmem:[#allocation8 + $0x1d8] sm:$0xff]
        %v510 = vld [vmem:[#allocation8 + $0x1e0] sm:$0xff]
        %v511 = vld [vmem:[#allocation8 + $0x1e8] sm:$0xff]
        %v512 = vld [vmem:[#allocation8 + $0x1f0] sm:$0xff]
        %v513 = vld [vmem:[#allocation8 + $0x1f8] sm:$0xff]
        %v514 = vld [vmem:[%s6] sm:$0xff]
        %v516 = vperm.slane %v514, 0
        %v517 = vperm.slane %v514, 1
        %v518 = vperm.slane %v514, 2
        %v519 = vperm.slane %v514, 3
        %v520 = vperm.slane %v514, 4
        %v521 = vperm.slane %v514, 5
        %v522 = vperm.slane %v514, 6
        %v523 = vperm.slane %v514, 7
        %v596 = vunpack.c.l.b16 %v450
        %v597 = vunpack.c.h.b16 %v450
        %v598 = vunpack.c.l.b16 %v451
        %v599 = vunpack.c.h.b16 %v451
        %v600 = vunpack.c.l.b16 %v452
        %v601 = vunpack.c.h.b16 %v452
        %v602 = vunpack.c.l.b16 %v453
        %v603 = vunpack.c.h.b16 %v453
        %v604 = vunpack.c.l.b16 %v454
        %v605 = vunpack.c.h.b16 %v454
        %v606 = vunpack.c.l.b16 %v455
        %v607 = vunpack.c.h.b16 %v455
        %v608 = vunpack.c.l.b16 %v456
        %v609 = vunpack.c.h.b16 %v456
        %v610 = vunpack.c.l.b16 %v457
        %v611 = vunpack.c.h.b16 %v457
        %v612 = vunpack.c.l.b16 %v458
        %v613 = vunpack.c.h.b16 %v458
        %v614 = vunpack.c.l.b16 %v459
        %v615 = vunpack.c.h.b16 %v459
        %v616 = vunpack.c.l.b16 %v460
        %v617 = vunpack.c.h.b16 %v460
        %v618 = vunpack.c.l.b16 %v461
        %v619 = vunpack.c.h.b16 %v461
        %v620 = vunpack.c.l.b16 %v462
        %v621 = vunpack.c.h.b16 %v462
        %v622 = vunpack.c.l.b16 %v463
        %v623 = vunpack.c.h.b16 %v463
        %v624 = vunpack.c.l.b16 %v464
        %v625 = vunpack.c.h.b16 %v464
        %v626 = vunpack.c.l.b16 %v465
        %v627 = vunpack.c.h.b16 %v465
        %v628 = vunpack.c.l.b16 %v466
        %v629 = vunpack.c.h.b16 %v466
        %v630 = vunpack.c.l.b16 %v467
        %v631 = vunpack.c.h.b16 %v467
        %v632 = vunpack.c.l.b16 %v468
        %v633 = vunpack.c.h.b16 %v468
        %v634 = vunpack.c.l.b16 %v469
        %v635 = vunpack.c.h.b16 %v469
        %v636 = vunpack.c.l.b16 %v470
        %v637 = vunpack.c.h.b16 %v470
        %v638 = vunpack.c.l.b16 %v471
        %v639 = vunpack.c.h.b16 %v471
        %v640 = vunpack.c.l.b16 %v472
        %v641 = vunpack.c.h.b16 %v472
        %v642 = vunpack.c.l.b16 %v473
        %v643 = vunpack.c.h.b16 %v473
        %v644 = vunpack.c.l.b16 %v474
        %v645 = vunpack.c.h.b16 %v474
        %v646 = vunpack.c.l.b16 %v475
        %v647 = vunpack.c.h.b16 %v475
        %v648 = vunpack.c.l.b16 %v476
        %v649 = vunpack.c.h.b16 %v476
        %v650 = vunpack.c.l.b16 %v477
        %v651 = vunpack.c.h.b16 %v477
        %v652 = vunpack.c.l.b16 %v478
        %v653 = vunpack.c.h.b16 %v478
        %v654 = vunpack.c.l.b16 %v479
        %v655 = vunpack.c.h.b16 %v479
        %v656 = vunpack.c.l.b16 %v480
        %v657 = vunpack.c.h.b16 %v480
        %v658 = vunpack.c.l.b16 %v481
        %v659 = vunpack.c.h.b16 %v481
        %v660 = vunpack.c.l.b16 %v482
        %v661 = vunpack.c.h.b16 %v482
        %v662 = vunpack.c.l.b16 %v483
        %v663 = vunpack.c.h.b16 %v483
        %v664 = vunpack.c.l.b16 %v484
        %v665 = vunpack.c.h.b16 %v484
        %v666 = vunpack.c.l.b16 %v485
        %v667 = vunpack.c.h.b16 %v485
        %v668 = vunpack.c.l.b16 %v486
        %v669 = vunpack.c.h.b16 %v486
        %v670 = vunpack.c.l.b16 %v487
        %v671 = vunpack.c.h.b16 %v487
        %v672 = vunpack.c.l.b16 %v488
        %v673 = vunpack.c.h.b16 %v488
        %v674 = vunpack.c.l.b16 %v489
        %v675 = vunpack.c.h.b16 %v489
        %v676 = vunpack.c.l.b16 %v490
        %v677 = vunpack.c.h.b16 %v490
        %v678 = vunpack.c.l.b16 %v491
        %v679 = vunpack.c.h.b16 %v491
        %v680 = vunpack.c.l.b16 %v492
        %v681 = vunpack.c.h.b16 %v492
        %v682 = vunpack.c.l.b16 %v493
        %v683 = vunpack.c.h.b16 %v493
        %v684 = vunpack.c.l.b16 %v494
        %v685 = vunpack.c.h.b16 %v494
        %v686 = vunpack.c.l.b16 %v495
        %v687 = vunpack.c.h.b16 %v495
        %v688 = vunpack.c.l.b16 %v496
        %v689 = vunpack.c.h.b16 %v496
        %v690 = vunpack.c.l.b16 %v497
        %v691 = vunpack.c.h.b16 %v497
        %v692 = vunpack.c.l.b16 %v498
        %v693 = vunpack.c.h.b16 %v498
        %v694 = vunpack.c.l.b16 %v499
        %v695 = vunpack.c.h.b16 %v499
        %v696 = vunpack.c.l.b16 %v500
        %v697 = vunpack.c.h.b16 %v500
        %v698 = vunpack.c.l.b16 %v501
        %v699 = vunpack.c.h.b16 %v501
        %v700 = vunpack.c.l.b16 %v502
        %v701 = vunpack.c.h.b16 %v502
        %v702 = vunpack.c.l.b16 %v503
        %v703 = vunpack.c.h.b16 %v503
        %v704 = vunpack.c.l.b16 %v504
        %v705 = vunpack.c.h.b16 %v504
        %v706 = vunpack.c.l.b16 %v505
        %v707 = vunpack.c.h.b16 %v505
        %v708 = vunpack.c.l.b16 %v506
        %v709 = vunpack.c.h.b16 %v506
        %v710 = vunpack.c.l.b16 %v507
        %v711 = vunpack.c.h.b16 %v507
        %v712 = vunpack.c.l.b16 %v508
        %v713 = vunpack.c.h.b16 %v508
        %v714 = vunpack.c.l.b16 %v509
        %v715 = vunpack.c.h.b16 %v509
        %v716 = vunpack.c.l.b16 %v510
        %v717 = vunpack.c.h.b16 %v510
        %v718 = vunpack.c.l.b16 %v511
        %v719 = vunpack.c.h.b16 %v511
        %v720 = vunpack.c.l.b16 %v512
        %v721 = vunpack.c.h.b16 %v512
        %v722 = vunpack.c.l.b16 %v513
        %v723 = vunpack.c.h.b16 %v513
        %v724 = vpack.c.b16 %v604, %v596
        %v725 = vpack.c.b16 %v605, %v597
        %v726 = vpack.c.b16 %v606, %v598
        %v727 = vpack.c.b16 %v607, %v599
        %v728 = vpack.c.b16 %v608, %v600
        %v729 = vpack.c.b16 %v609, %v601
        %v730 = vpack.c.b16 %v610, %v602
        %v731 = vpack.c.b16 %v611, %v603
        %v732 = vpack.c.b16 %v620, %v612
        %v733 = vpack.c.b16 %v621, %v613
        %v734 = vpack.c.b16 %v622, %v614
        %v735 = vpack.c.b16 %v623, %v615
        %v736 = vpack.c.b16 %v624, %v616
        %v737 = vpack.c.b16 %v625, %v617
        %v738 = vpack.c.b16 %v626, %v618
        %v739 = vpack.c.b16 %v627, %v619
        %v740 = vpack.c.b16 %v636, %v628
        %v741 = vpack.c.b16 %v637, %v629
        %v742 = vpack.c.b16 %v638, %v630
        %v743 = vpack.c.b16 %v639, %v631
        %v744 = vpack.c.b16 %v640, %v632
        %v745 = vpack.c.b16 %v641, %v633
        %v746 = vpack.c.b16 %v642, %v634
        %v747 = vpack.c.b16 %v643, %v635
        %v748 = vpack.c.b16 %v652, %v644
        %v749 = vpack.c.b16 %v653, %v645
        %v750 = vpack.c.b16 %v654, %v646
        %v751 = vpack.c.b16 %v655, %v647
        %v752 = vpack.c.b16 %v656, %v648
        %v753 = vpack.c.b16 %v657, %v649
        %v754 = vpack.c.b16 %v658, %v650
        %v755 = vpack.c.b16 %v659, %v651
        %v756 = vpack.c.b16 %v668, %v660
        %v757 = vpack.c.b16 %v669, %v661
        %v758 = vpack.c.b16 %v670, %v662
        %v759 = vpack.c.b16 %v671, %v663
        %v760 = vpack.c.b16 %v672, %v664
        %v761 = vpack.c.b16 %v673, %v665
        %v762 = vpack.c.b16 %v674, %v666
        %v763 = vpack.c.b16 %v675, %v667
        %v764 = vpack.c.b16 %v684, %v676
        %v765 = vpack.c.b16 %v685, %v677
        %v766 = vpack.c.b16 %v686, %v678
        %v767 = vpack.c.b16 %v687, %v679
        %v768 = vpack.c.b16 %v688, %v680
        %v769 = vpack.c.b16 %v689, %v681
        %v770 = vpack.c.b16 %v690, %v682
        %v771 = vpack.c.b16 %v691, %v683
        %v772 = vpack.c.b16 %v700, %v692
        %v773 = vpack.c.b16 %v701, %v693
        %v774 = vpack.c.b16 %v702, %v694
        %v775 = vpack.c.b16 %v703, %v695
        %v776 = vpack.c.b16 %v704, %v696
        %v777 = vpack.c.b16 %v705, %v697
        %v778 = vpack.c.b16 %v706, %v698
        %v779 = vpack.c.b16 %v707, %v699
        %v780 = vpack.c.b16 %v716, %v708
        %v781 = vpack.c.b16 %v717, %v709
        %v782 = vpack.c.b16 %v718, %v710
        %v783 = vpack.c.b16 %v719, %v711
        %v784 = vpack.c.b16 %v720, %v712
        %v785 = vpack.c.b16 %v721, %v713
        %v786 = vpack.c.b16 %v722, %v714
        %v787 = vpack.c.b16 %v723, %v715
        %852 = vmatpush.bf16.msra.mxu0 %v780
        %853 = vmatpush.bf16.msra.mxu0 %v772
        %854 = vmatpush.bf16.msra.mxu0 %v764
        %855 = vmatpush.bf16.msra.mxu0 %v756
        %856 = vmatpush.bf16.msra.mxu0 %v748
        %857 = vmatpush.bf16.msra.mxu0 %v740
        %858 = vmatpush.bf16.msra.mxu0 %v732
        %859 = vmatpush.bf16.msra.mxu0 %v724
        %860 = vmatmul.bf16.gmra.mxu0 %v449
        %v861 = vpop.f32.mrf.mxu0
        %v862 = vadd.f32 %v516, %v861
        %v863 = vpop.f32.mrf.mxu0
        %v864 = vadd.f32 %v516, %v863
        %865 = vdwg.mxu0
        %866 = vmatpush.bf16.msra.mxu0 %v781
        %867 = vmatpush.bf16.msra.mxu0 %v773
        %868 = vmatpush.bf16.msra.mxu0 %v765
        %869 = vmatpush.bf16.msra.mxu0 %v757
        %870 = vmatpush.bf16.msra.mxu0 %v749
        %871 = vmatpush.bf16.msra.mxu0 %v741
        %872 = vmatpush.bf16.msra.mxu0 %v733
        %873 = vmatpush.bf16.msra.mxu0 %v725
        %874 = vmatmul.bf16.gmra.mxu0 %v449
        %v875 = vpop.f32.mrf.mxu0
        %v876 = vadd.f32 %v517, %v875
        %v877 = vpop.f32.mrf.mxu0
        %v878 = vadd.f32 %v517, %v877
        %879 = vdwg.mxu0
        %880 = vmatpush.bf16.msra.mxu0 %v782
        %881 = vmatpush.bf16.msra.mxu0 %v774
        %882 = vmatpush.bf16.msra.mxu0 %v766
        %883 = vmatpush.bf16.msra.mxu0 %v758
        %884 = vmatpush.bf16.msra.mxu0 %v750
        %885 = vmatpush.bf16.msra.mxu0 %v742
        %886 = vmatpush.bf16.msra.mxu0 %v734
        %887 = vmatpush.bf16.msra.mxu0 %v726
        %888 = vmatmul.bf16.gmra.mxu0 %v449
        %v889 = vpop.f32.mrf.mxu0
        %v890 = vadd.f32 %v518, %v889
        %v891 = vpop.f32.mrf.mxu0
        %v892 = vadd.f32 %v518, %v891
        %893 = vdwg.mxu0
        %894 = vmatpush.bf16.msra.mxu0 %v783
        %895 = vmatpush.bf16.msra.mxu0 %v775
        %896 = vmatpush.bf16.msra.mxu0 %v767
        %897 = vmatpush.bf16.msra.mxu0 %v759
        %898 = vmatpush.bf16.msra.mxu0 %v751
        %899 = vmatpush.bf16.msra.mxu0 %v743
        %900 = vmatpush.bf16.msra.mxu0 %v735
        %901 = vmatpush.bf16.msra.mxu0 %v727
        %902 = vmatmul.bf16.gmra.mxu0 %v449
        %v903 = vpop.f32.mrf.mxu0
        %v904 = vadd.f32 %v519, %v903
        %v905 = vpop.f32.mrf.mxu0
        %v906 = vadd.f32 %v519, %v905
        %907 = vdwg.mxu0
        %908 = vmatpush.bf16.msra.mxu0 %v784
        %909 = vmatpush.bf16.msra.mxu0 %v776
        %910 = vmatpush.bf16.msra.mxu0 %v768
        %911 = vmatpush.bf16.msra.mxu0 %v760
        %912 = vmatpush.bf16.msra.mxu0 %v752
        %913 = vmatpush.bf16.msra.mxu0 %v744
        %914 = vmatpush.bf16.msra.mxu0 %v736
        %915 = vmatpush.bf16.msra.mxu0 %v728
        %916 = vmatmul.bf16.gmra.mxu0 %v449
        %v917 = vpop.f32.mrf.mxu0
        %v918 = vadd.f32 %v520, %v917
        %v919 = vpop.f32.mrf.mxu0
        %v920 = vadd.f32 %v520, %v919
        %921 = vdwg.mxu0
        %922 = vmatpush.bf16.msra.mxu0 %v785
        %923 = vmatpush.bf16.msra.mxu0 %v777
        %924 = vmatpush.bf16.msra.mxu0 %v769
        %925 = vmatpush.bf16.msra.mxu0 %v761
        %926 = vmatpush.bf16.msra.mxu0 %v753
        %927 = vmatpush.bf16.msra.mxu0 %v745
        %928 = vmatpush.bf16.msra.mxu0 %v737
        %929 = vmatpush.bf16.msra.mxu0 %v729
        %930 = vmatmul.bf16.gmra.mxu0 %v449
        %v931 = vpop.f32.mrf.mxu0
        %v932 = vadd.f32 %v521, %v931
        %v933 = vpop.f32.mrf.mxu0
        %v934 = vadd.f32 %v521, %v933
        %935 = vdwg.mxu0
        %936 = vmatpush.bf16.msra.mxu0 %v786
        %937 = vmatpush.bf16.msra.mxu0 %v778
        %938 = vmatpush.bf16.msra.mxu0 %v770
        %939 = vmatpush.bf16.msra.mxu0 %v762
        %940 = vmatpush.bf16.msra.mxu0 %v754
        %941 = vmatpush.bf16.msra.mxu0 %v746
        %942 = vmatpush.bf16.msra.mxu0 %v738
        %943 = vmatpush.bf16.msra.mxu0 %v730
        %944 = vmatmul.bf16.gmra.mxu0 %v449
        %v945 = vpop.f32.mrf.mxu0
        %v946 = vadd.f32 %v522, %v945
        %v947 = vpop.f32.mrf.mxu0
        %v948 = vadd.f32 %v522, %v947
        %949 = vdwg.mxu0
        %950 = vmatpush.bf16.msra.mxu0 %v787
        %951 = vmatpush.bf16.msra.mxu0 %v779
        %952 = vmatpush.bf16.msra.mxu0 %v771
        %953 = vmatpush.bf16.msra.mxu0 %v763
        %954 = vmatpush.bf16.msra.mxu0 %v755
        %955 = vmatpush.bf16.msra.mxu0 %v747
        %956 = vmatpush.bf16.msra.mxu0 %v739
        %957 = vmatpush.bf16.msra.mxu0 %v731
        %958 = vmatmul.bf16.gmra.mxu0 %v449
        %v959 = vpop.f32.mrf.mxu0
        %v960 = vadd.f32 %v523, %v959
        %v961 = vpop.f32.mrf.mxu0
        %v962 = vadd.f32 %v523, %v961
        %963 = vdwg.mxu0
        %v964 = vmax.f32 %v862, 0.0
        %v965 = vmax.f32 %v876, 0.0
        %v966 = vmax.f32 %v890, 0.0
        %v967 = vmax.f32 %v904, 0.0
        %v968 = vmax.f32 %v918, 0.0
        %v969 = vmax.f32 %v932, 0.0
        %v970 = vmax.f32 %v946, 0.0
        %v971 = vmax.f32 %v960, 0.0
        %v972 = vmax.f32 %v864, 0.0
        %v973 = vmax.f32 %v878, 0.0
        %v974 = vmax.f32 %v892, 0.0
        %v975 = vmax.f32 %v906, 0.0
        %v976 = vmax.f32 %v920, 0.0
        %v977 = vmax.f32 %v934, 0.0
        %v978 = vmax.f32 %v948, 0.0
        %v979 = vmax.f32 %v962, 0.0
        %v980 = vld [vmem:[#allocation2] sm:$0xff]
        %v981 = vmax.f32 %v964, %v972
        %v982 = vrot.slane %v981, 4
        %v983 = vmax.f32 %v981, %v982
        %v984 = vrot.slane %v983, 2
        %v985 = vmax.f32 %v983, %v984
        %v986 = vrot.slane %v985, 1
        %v987 = vmax.f32 %v985, %v986
        %v988 = vmax.f32 %v965, %v973
        %v989 = vrot.slane %v988, 4
        %v990 = vmax.f32 %v988, %v989
        %v991 = vrot.slane %v990, 2
        %v992 = vmax.f32 %v990, %v991
        %v993 = vrot.slane %v992, 1
        %v994 = vmax.f32 %v992, %v993
        %v995 = vmax.f32 %v966, %v974
        %v996 = vrot.slane %v995, 4
        %v997 = vmax.f32 %v995, %v996
        %v998 = vrot.slane %v997, 2
        %v999 = vmax.f32 %v997, %v998
        %v1000 = vrot.slane %v999, 1
        %v1001 = vmax.f32 %v999, %v1000
        %v1002 = vmax.f32 %v967, %v975
        %v1003 = vrot.slane %v1002, 4
        %v1004 = vmax.f32 %v1002, %v1003
        %v1005 = vrot.slane %v1004, 2
        %v1006 = vmax.f32 %v1004, %v1005
        %v1007 = vrot.slane %v1006, 1
        %v1008 = vmax.f32 %v1006, %v1007
        %v1009 = vmax.f32 %v968, %v976
        %v1010 = vrot.slane %v1009, 4
        %v1011 = vmax.f32 %v1009, %v1010
        %v1012 = vrot.slane %v1011, 2
        %v1013 = vmax.f32 %v1011, %v1012
        %v1014 = vrot.slane %v1013, 1
        %v1015 = vmax.f32 %v1013, %v1014
        %v1016 = vmax.f32 %v969, %v977
        %v1017 = vrot.slane %v1016, 4
        %v1018 = vmax.f32 %v1016, %v1017
        %v1019 = vrot.slane %v1018, 2
        %v1020 = vmax.f32 %v1018, %v1019
        %v1021 = vrot.slane %v1020, 1
        %v1022 = vmax.f32 %v1020, %v1021
        %v1023 = vmax.f32 %v970, %v978
        %v1024 = vrot.slane %v1023, 4
        %v1025 = vmax.f32 %v1023, %v1024
        %v1026 = vrot.slane %v1025, 2
        %v1027 = vmax.f32 %v1025, %v1026
        %v1028 = vrot.slane %v1027, 1
        %v1029 = vmax.f32 %v1027, %v1028
        %v1030 = vmax.f32 %v971, %v979
        %v1031 = vrot.slane %v1030, 4
        %v1032 = vmax.f32 %v1030, %v1031
        %v1033 = vrot.slane %v1032, 2
        %v1034 = vmax.f32 %v1032, %v1033
        %v1035 = vrot.slane %v1034, 1
        %v1036 = vmax.f32 %v1034, %v1035
        %v1045 = vrot.slane %v994, 7
        %v1046 = vrot.slane %v1001, 6
        %v1047 = vrot.slane %v1008, 5
        %v1048 = vrot.slane %v1015, 4
        %v1049 = vrot.slane %v1022, 3
        %v1050 = vrot.slane %v1029, 2
        %v1051 = vrot.slane %v1036, 1
        %v1052 = vsel %vm369, %v987, %v1045
        %vm1053 = vcmask 1042434
        %v1054 = vsel %vm1053, %v1046, %v1047
        %v1055 = vsel %vm370, %v1052, %v1054
        %vm1056 = vcmask 1044484
        %v1057 = vsel %vm1056, %v1048, %v1049
        %vm1058 = vcmask 1046534
        %v1059 = vsel %vm1058, %v1050, %v1051
        %vm1060 = vcmask 1045508
        %v1061 = vsel %vm1060, %v1057, %v1059
        %vm1062 = vcmask 1043456
        %v1063 = vsel %vm1062, %v1055, %v1061
        %v1065 = vmax.f32 %v980, %v1063
        %1066 = vst [vmem:[#allocation2] sm:$0xff] %v1065
        // Predicated region
        $region65: #{tpu_custom_call.1} parent=47 // pred_check
          %p1067 = pneg %p352
        $region66: #{tpu_custom_call.1} parent=47 // pred_check_branch
          %1069 = sbr.rel (%p1067) target = $region68
        $region67: #{tpu_custom_call.1} parent=47 // pred_region
          %v1070 = vld [vmem:[#allocation2] sm:$0xff]
          %1071 = vst [vmem:[%s340] sm:$0xff] %v1070
        $region68: #{tpu_custom_call.1} parent=47 // pred_fallthru
          _
        %s1072 = sand.u32 %s197, 1
        %s1073 = scalar_lea.sflag [#allocation5], %s1072
        %s1074 = sand.u32 %s197, 1
        %s1075 = smul.addr %s1074, 8
        %s1076 = scalar_lea.vmem [#allocation9], %s1075
        // Predicated region
        $region69: #{tpu_custom_call.1} parent=47 // pred_check
          %p1077 = pneg %p207
        $region70: #{tpu_custom_call.1} parent=47 // pred_check_branch
          %1079 = sbr.rel (%p1077) target = $region72
        $region71: #{tpu_custom_call.1} parent=47 // pred_region
          %1081 = vsyncadd %s1073, 0
          %s1082 = smul.addr %s27, 8
          %s1083 = scalar_lea.hbm %s7, %s1082
          %s1085 = sshll.u32 %s1076, 4
          %s1086 = int_to_ptr.vmem [resolvable:$true] %s1085
          %s1087 = sshll.u32 %s1083, 4
          %s1088 = int_to_ptr.hbm [resolvable:$true] %s1087
          %1090 = dma.vmem_to_hbm [thread:$0]  %s1086, 128, %s1088, %s1073
        $region72: #{tpu_custom_call.1} parent=47 // pred_fallthru
          _
      $region48: #{tpu_custom_call.1} parent=5 // pred_fallthru
        _
      %p1091 = scmp.le.s32.totalorder 2, %s18
      // Predicated region
      $region73: #{tpu_custom_call.1} parent=5 // pred_check
        %p1092 = pneg %p1091
      $region74: #{tpu_custom_call.1} parent=5 // pred_check_branch
        %1094 = sbr.rel (%p1092) target = $region76
      $region75: #{tpu_custom_call.1} parent=5 // pred_region
        %s1095 = ssub.s32 %s18, 2
        // Predicated region
        $region77: #{tpu_custom_call.1} parent=75 // pred_check
          %p1096 = pneg %p213
        $region78: #{tpu_custom_call.1} parent=75 // pred_check_branch
          %1098 = sbr.rel (%p1096) target = $region80
        $region79: #{tpu_custom_call.1} parent=75 // pred_region
          %s1099 = sand.u32 %s198, 1
          %s1100 = scalar_lea.sflag [#allocation5], %s1099
          %s1101 = sand.u32 %s198, 1
          %s1102 = smul.addr %s1101, 8
          %s1103 = scalar_lea.vmem [#allocation9], %s1102
          %1105 = dma.done %s1100, 128
        $region80: #{tpu_custom_call.1} parent=75 // pred_fallthru
          _
      $region76: #{tpu_custom_call.1} parent=5 // pred_fallthru
        _
    $region6: #{tpu_custom_call.1} parent=1 // loop_footer
      %s22 = sadd.s32 1, %s18
    $region7: #{tpu_custom_call.1} parent=1 // loop_footer_branch
      %17 = sbr.rel target = $region3
    $region8: #{tpu_custom_call.1} parent=1 // loop_exit
      _
    %1106 = vsyncpa [#allocation4], 1
    %s1107 = scalar_lea.sflag [#allocation4], 1
    %1108 = vsyncpa %s1107, 1
    %1109 = vsyncpa [#allocation7], 1
    %1110 = vsyncpa [#allocation5], 1
    %s1111 = scalar_lea.sflag [#allocation5], 1
    %1112 = vsyncpa %s1111, 1

</llo_original>
